<compile_context>
chip_gen: v7x
topology: tpu7x:2x2x1
jax: 0.10.0
libtpu: 0.0.40
codegen_flags: <defaults>
</compile_context>

<pallas_src>
import functools

import jax
import jax.numpy as jnp
from jax.experimental import pallas as pl
from jax.experimental.pallas import tpu as pltpu


# ------------------------------- Pallas kernels ------------------------------- #

def _sepconv_kernel(*refs, H, W, Wo, pad, dil, stride, TH_in, TH_out, RT, bot,
                    pre_relu, has_res):
    """(optional ReLU) -> depthwise 3x3 (dilated, strided) -> BN-folded 1x1 matmul
    + bias (+ fused residual).  Input rows (with halo) are DMA'd manually from HBM
    so no padded copy of the activation is ever materialized."""
    if has_res:
        x_hbm, dw_ref, wp_ref, b_ref, res_ref, o_ref, xbuf, sem = refs
    else:
        x_hbm, dw_ref, wp_ref, b_ref, o_ref, xbuf, sem = refs
        res_ref = None

    n = pl.program_id(0)
    rt = pl.program_id(1)
    cin = xbuf.shape[-1]
    Wpad = xbuf.shape[1]            # W + 2*pad

    def dma(src, dst):
        cp = pltpu.make_async_copy(src, dst, sem)
        cp.start()
        cp.wait()

    dst_cols = pl.ds(pad, W)

    # ---- fill xbuf with the (logically zero-padded) input row window ----
    # TODO(synk): double-buffer this DMA across row tiles (emit_pipeline) to hide it.
    if RT == 1:
        dma(x_hbm.at[n, pl.ds(0, H)], xbuf.at[pl.ds(pad, H), dst_cols])
    else:
        @pl.when(rt == 0)
        def _():
            dma(x_hbm.at[n, pl.ds(0, TH_in - pad)],
                xbuf.at[pl.ds(pad, TH_in - pad), dst_cols])

        @pl.when(rt == RT - 1)
        def _():
            dma(x_hbm.at[n, pl.ds(H - (TH_in - bot), TH_in - bot)],
                xbuf.at[pl.ds(0, TH_in - bot), dst_cols])

        if RT > 2:
            @pl.when(jnp.logical_and(rt > 0, rt < RT - 1))
            def _():
                r_lo = rt * (TH_out * stride) - pad
                dma(x_hbm.at[n, pl.ds(r_lo, TH_in)],
                    xbuf.at[pl.ds(0, TH_in), dst_cols])

    # ---- zero the halo borders (W always; H only at the first / last tile) ----
    if pad > 0:
        xbuf[:, 0:pad, :] = jnp.zeros((TH_in, pad, cin), xbuf.dtype)
        xbuf[:, pad + W:, :] = jnp.zeros((TH_in, pad, cin), xbuf.dtype)

        @pl.when(rt == 0)
        def _():
            xbuf[0:pad, :, :] = jnp.zeros((pad, Wpad, cin), xbuf.dtype)

    if bot > 0:
        @pl.when(rt == RT - 1)
        def _():
            xbuf[TH_in - bot:, :, :] = jnp.zeros((bot, Wpad, cin), xbuf.dtype)

    # ---- pre-activation ReLU (relu1/relu2/relu3 of the Block) ----
    if pre_relu:
        xbuf[...] = jnp.maximum(xbuf[...], 0.0)

    # ---- depthwise 3x3 (dilated, stride folded in): 9 shifted taps on the VPU ----
    # TODO(synk): tap shifts could use pltpu.roll (XLU slot) to offload the VALU.
    dw = dw_ref[...]                                   # (3, 3, Cin)
    acc = jnp.zeros((TH_out, Wo, cin), jnp.float32)
    for kh in range(3):
        for kw in range(3):
            if stride == 1:
                tap = xbuf[pl.ds(kh * dil, TH_out), pl.ds(kw * dil, Wo), :]
            else:
                tap = xbuf[pl.ds(kh * dil, TH_out, stride),
                           pl.ds(kw * dil, Wo, stride), :]
            acc = acc + tap.astype(jnp.float32) * dw[kh, kw]

    # ---- BN-folded pointwise 1x1 on the MXU: bf16 operands, f32 accumulation ----
    y = jnp.dot(acc.reshape(TH_out * Wo, cin).astype(jnp.bfloat16), wp_ref[...],
                preferred_element_type=jnp.float32)
    y = y + b_ref[...]                                 # (1, Cout) broadcast
    y = y.reshape(TH_out, Wo, -1)
    if has_res:                                        # fused "x += shortcut"
        y = y + res_ref[...].astype(jnp.float32)
    o_ref[...] = y.astype(o_ref.dtype)


def _shortcut_kernel(x_ref, w_ref, b_ref, o_ref, *, TH_out, Wo, stride):
    """BN-folded 1x1 conv shortcut with the stride folded in (only the strided
    rows/cols are read and the matmul runs at output resolution)."""
    if stride == 1:
        xs = x_ref[...]                                # (TH_out, W, Cin)
    else:
        xs = x_ref[pl.ds(0, TH_out, stride), pl.ds(0, Wo, stride), :]
    cin = xs.shape[-1]
    y = jnp.dot(xs.reshape(TH_out * Wo, cin).astype(jnp.bfloat16), w_ref[...],
                preferred_element_type=jnp.float32) + b_ref[...]
    o_ref[...] = y.reshape(TH_out, Wo, -1).astype(o_ref.dtype)


# ---------------------------------- Wrappers ---------------------------------- #

def _pick_tile(total, target):
    t = min(total, max(1, target))
    while total % t:
        t -= 1
    return t


_VMEM_LIMIT = 48 * 1024 * 1024  # safe on v5e/v6e (128 MiB) and within v7x's 64 MiB


def sepconv2d(x, dw, wp_eff, b_eff, *, stride, dilation, pre_relu=True,
              residual=None, row_tile=8):
    N, H, W, Cin = x.shape
    Cout = wp_eff.shape[1]
    pad = dilation
    Ho = (H - 1) // stride + 1
    Wo = (W - 1) // stride + 1
    TH_out = _pick_tile(Ho, row_tile)
    RT = Ho // TH_out
    TH_in = (TH_out - 1) * stride + 2 * pad + 1        # input rows (incl. halo) per tile
    Wp = W + 2 * pad
    bot = max(0, (Ho - 1) * stride + pad + 1 - H)      # bottom zero-halo rows (last tile)
    if RT > 1:
        assert TH_in - pad <= H and TH_in - bot <= H
    else:
        assert pad + H + bot == TH_in
    if residual is not None:
        assert residual.shape == (N, Ho, Wo, Cout), residual.shape

    kern = functools.partial(
        _sepconv_kernel, H=H, W=W, Wo=Wo, pad=pad, dil=dilation, stride=stride,
        TH_in=TH_in, TH_out=TH_out, RT=RT, bot=bot, pre_relu=pre_relu,
        has_res=residual is not None)

    in_specs = [
        pl.BlockSpec(memory_space=pl.ANY),                              # x stays in HBM
        pl.BlockSpec((3, 3, Cin), lambda n, rt: (0, 0, 0)),             # depthwise w
        pl.BlockSpec((Cin, Cout), lambda n, rt: (0, 0)),                # folded 1x1 w (bf16)
        pl.BlockSpec((1, Cout), lambda n, rt: (0, 0)),                  # folded bias
    ]
    args = [x, dw, wp_eff.astype(jnp.bfloat16), b_eff.reshape(1, Cout)]
    if residual is not None:
        in_specs.append(pl.BlockSpec((None, TH_out, Wo, Cout),
                                     lambda n, rt: (n, rt, 0, 0)))
        args.append(residual)

    # TODO(synk): add a Cout grid axis (128/256-lane tiles) for production channel counts.
    return pl.pallas_call(
        kern,
        out_shape=jax.ShapeDtypeStruct((N, Ho, Wo, Cout), x.dtype),
        grid_spec=pltpu.PrefetchScalarGridSpec(
            num_scalar_prefetch=0,
            grid=(N, RT),
            in_specs=in_specs,
            out_specs=pl.BlockSpec((None, TH_out, Wo, Cout),
                                   lambda n, rt: (n, rt, 0, 0)),
            scratch_shapes=[pltpu.VMEM((TH_in, Wp, Cin), x.dtype),
                            pltpu.SemaphoreType.DMA(())],
        ),
        compiler_params=pltpu.CompilerParams(
            dimension_semantics=("parallel", "parallel"),
            vmem_limit_bytes=_VMEM_LIMIT),
    )(*args)


def shortcut_conv(x, w_eff, b_eff, *, stride, row_tile=8):
    N, H, W, Cin = x.shape
    Cout = w_eff.shape[1]
    Ho = (H - 1) // stride + 1
    Wo = (W - 1) // stride + 1
    TH_out = _pick_tile(Ho, row_tile)
    RT = Ho // TH_out
    kern = functools.partial(_shortcut_kernel, TH_out=TH_out, Wo=Wo, stride=stride)
    return pl.pallas_call(
        kern,
        out_shape=jax.ShapeDtypeStruct((N, Ho, Wo, Cout), x.dtype),
        grid_spec=pltpu.PrefetchScalarGridSpec(
            num_scalar_prefetch=0,
            grid=(N, RT),
            in_specs=[
                pl.BlockSpec((None, TH_out * stride, W, Cin),
                             lambda n, rt: (n, rt, 0, 0)),
                pl.BlockSpec((Cin, Cout), lambda n, rt: (0, 0)),
                pl.BlockSpec((1, Cout), lambda n, rt: (0, 0)),
            ],
            out_specs=pl.BlockSpec((None, TH_out, Wo, Cout),
                                   lambda n, rt: (n, rt, 0, 0)),
        ),
        compiler_params=pltpu.CompilerParams(
            dimension_semantics=("parallel", "parallel"),
            vmem_limit_bytes=_VMEM_LIMIT),
    )(x, w_eff.astype(jnp.bfloat16), b_eff.reshape(1, Cout))


# ---------------------------- Parameter construction --------------------------- #

def _bn_fold(gamma, beta, mean, var, eps=1e-5):
    s = gamma / jnp.sqrt(var + eps)
    return s, beta - mean * s


def _init_bn(key, c):
    k1, k2, k3, k4 = jax.random.split(key, 4)
    gamma = 1.0 + 0.1 * jax.random.normal(k1, (c,), jnp.float32)
    beta = 0.1 * jax.random.normal(k2, (c,), jnp.float32)
    mean = 0.1 * jax.random.normal(k3, (c,), jnp.float32)
    var = 1.0 + 0.5 * jax.random.uniform(k4, (c,), jnp.float32)
    return gamma, beta, mean, var


def init_sepconv_params(key, cin, cout):
    k_dw, k_pw, k_bn1, k_bn2 = jax.random.split(key, 4)
    dw = 0.2 * jax.random.normal(k_dw, (3, 3, cin), jnp.float32)   # depthwise 3x3
    pw = 0.2 * jax.random.normal(k_pw, (cin, cout), jnp.float32)   # pointwise 1x1
    s1, b1 = _bn_fold(*_init_bn(k_bn1, cin))    # BN after depthwise
    s2, b2 = _bn_fold(*_init_bn(k_bn2, cout))   # BN after pointwise
    wp_eff = (s1[:, None] * pw) * s2[None, :]
    bias_eff = (b1 @ pw) * s2 + b2
    return dw, wp_eff, bias_eff


def init_shortcut_params(key, cin, cout):
    k_w, k_bn = jax.random.split(key)
    w = 0.2 * jax.random.normal(k_w, (cin, cout), jnp.float32)     # 1x1 conv
    s, b = _bn_fold(*_init_bn(k_bn, cout))                         # BN
    return w * s[None, :], b


# -------------------------------- Block forward -------------------------------- #

def block_forward(x_nhwc, params, *, stride, dilation,
                  skip_connection_type="conv", row_tile=8):
    if skip_connection_type == "conv":
        res = shortcut_conv(x_nhwc, params["sc_w"], params["sc_b"],
                            stride=stride, row_tile=row_tile)
    elif skip_connection_type == "sum":
        res = x_nhwc
    else:
        raise ValueError("Wrong skip_connection_type.")

    y = sepconv2d(x_nhwc, *params["sep1"], stride=1, dilation=dilation,
                  pre_relu=True, row_tile=row_tile)                       # relu1 + sepconv1
    y = sepconv2d(y, *params["sep2"], stride=1, dilation=dilation,
                  pre_relu=True, row_tile=row_tile)                       # relu2 + sepconv2
    y = sepconv2d(y, *params["sep3"], stride=stride, dilation=dilation,
                  pre_relu=True, residual=res, row_tile=row_tile)         # relu3 + sepconv3 + add
    return y


# ----------------------------- Pure-JAX reference ------------------------------ #

def _ref_sepconv(x, dw, wp, b, *, stride, dilation):
    cin = x.shape[-1]
    yd = jax.lax.conv_general_dilated(
        x, dw[:, :, None, :],
        window_strides=(stride, stride),
        padding=((dilation, dilation), (dilation, dilation)),
        rhs_dilation=(dilation, dilation),
        dimension_numbers=("NHWC", "HWIO", "NHWC"),
        feature_group_count=cin)
    wp_q = wp.astype(jnp.bfloat16).astype(jnp.float32)   # match kernel's bf16 weights
    return jnp.einsum("nhwc,cd->nhwd", yd, wp_q) + b


def block_reference(x, params, *, stride, dilation, skip_connection_type):
    if skip_connection_type == "conv":
        w_q = params["sc_w"].astype(jnp.bfloat16).astype(jnp.float32)
        sc = jnp.einsum("nhwc,cd->nhwd", x[:, ::stride, ::stride, :], w_q) + params["sc_b"]
    else:
        sc = x
    y = x
    for name, s in (("sep1", 1), ("sep2", 1), ("sep3", stride)):
        dw, wp, b = params[name]
        y = _ref_sepconv(jnp.maximum(y, 0.0), dw, wp, b, stride=s, dilation=dilation)
    return y + sc


# ------------------------------------- Main ------------------------------------ #

if __name__ == "__main__":
    key = jax.random.PRNGKey(0)

    # -------- config 1: conv shortcut, stride 2, dilation 1, grow_first=True --------
    N, Cin, Cout, H, W = 2, 8, 16, 16, 16
    stride, dilation = 2, 1
    mid = Cout  # grow_first=True

    kx, k1, k2, k3, ksc, k5 = jax.random.split(key, 6)
    x_nchw = jax.random.normal(kx, (N, Cin, H, W), jnp.float32)   # PyTorch NCHW input
    x = jnp.transpose(x_nchw, (0, 2, 3, 1))                       # -> NHWC

    params = {
        "sep1": init_sepconv_params(k1, Cin, mid),
        "sep2": init_sepconv_params(k2, mid, Cout),
        "sep3": init_sepconv_params(k3, Cout, Cout),
    }
    params["sc_w"], params["sc_b"] = init_shortcut_params(ksc, Cin, Cout)

    out = block_forward(x, params, stride=stride, dilation=dilation,
                        skip_connection_type="conv", row_tile=4)
    out = jax.block_until_ready(out)
    ref = block_reference(x, params, stride=stride, dilation=dilation,
                          skip_connection_type="conv")

    out_nchw = jnp.transpose(out, (0, 3, 1, 2))
    expected_h = (H + 2 * dilation - dilation * 2 - 1) // stride + 1
    assert out_nchw.shape == (N, Cout, expected_h, expected_h), out_nchw.shape
    assert bool(jnp.all(jnp.isfinite(out)))
    assert bool(jnp.allclose(out, ref, atol=1e-1, rtol=1e-1)), \
        float(jnp.max(jnp.abs(out - ref)))

    # -------- config 2: sum shortcut, stride 1, dilation 2 --------
    C2 = 16
    x2 = jax.random.normal(k5, (N, H, W, C2), jnp.float32)
    kk = jax.random.split(k5, 3)
    params2 = {
        "sep1": init_sepconv_params(kk[0], C2, C2),
        "sep2": init_sepconv_params(kk[1], C2, C2),
        "sep3": init_sepconv_params(kk[2], C2, C2),
    }
    out2 = block_forward(x2, params2, stride=1, dilation=2,
                         skip_connection_type="sum", row_tile=4)
    out2 = jax.block_until_ready(out2)
    ref2 = block_reference(x2, params2, stride=1, dilation=2,
                           skip_connection_type="sum")
    assert out2.shape == (N, H, W, C2), out2.shape
    assert bool(jnp.all(jnp.isfinite(out2)))
    assert bool(jnp.allclose(out2, ref2, atol=1e-1, rtol=1e-1)), \
        float(jnp.max(jnp.abs(out2 - ref2)))

    print("KERNEL_OK")
</pallas_src>

<mosaic_0001>
module attributes {stable_mosaic.version = 11 : i64} {
  func.func @_shortcut_kernel(%arg0: i32, %arg1: i32, %arg2: memref<1x8x16x8xf32, #tpu.memory_space<vmem>>, %arg3: memref<8x16xbf16, #tpu.memory_space<vmem>>, %arg4: memref<1x16xf32, #tpu.memory_space<vmem>>, %arg5: memref<1x4x8x16xf32, #tpu.memory_space<vmem>>) attributes {dimension_semantics = [#tpu.dimension_semantics<parallel>, #tpu.dimension_semantics<parallel>], iteration_bounds = array<i64: 2, 2>, scalar_prefetch = 0 : i64, scratch_operands = 0 : i64, tpu.core_type = #tpu.core_type<tc>, window_params = [{transform_indices = @transform_0, window_bounds = array<i64: 1, 8, 16, 8>}, {pipeline_mode = #tpu.pipeline_mode<synchronous>, transform_indices = @transform_1, window_bounds = array<i64: 8, 16>}, {pipeline_mode = #tpu.pipeline_mode<synchronous>, transform_indices = @transform_2, window_bounds = array<i64: 1, 16>}, {transform_indices = @transform_3, window_bounds = array<i64: 1, 4, 8, 16>}]} {
    %c0 = arith.constant 0 : index
    %c0_0 = arith.constant 0 : index
    %c0_1 = arith.constant 0 : index
    %c0_2 = arith.constant 0 : index
    %0 = tpu.strided_load %arg2[%c0, %c0_0, %c0_1, %c0_2] {strides = array<i32: 1, 2, 2, 1>} : memref<1x8x16x8xf32, #tpu.memory_space<vmem>>, vector<1x4x8x8xf32>
    %1 = vector.shape_cast %0 : vector<1x4x8x8xf32> to vector<4x8x8xf32>
    %2 = vector.shape_cast %1 : vector<4x8x8xf32> to vector<32x8xf32>
    %3 = arith.truncf %2 : vector<32x8xf32> to vector<32x8xbf16>
    %c0_3 = arith.constant 0 : index
    %c0_4 = arith.constant 0 : index
    %4 = vector.load %arg3[%c0_3, %c0_4] : memref<8x16xbf16, #tpu.memory_space<vmem>>, vector<8x16xbf16>
    %cst = arith.constant dense<0.000000e+00> : vector<32x16xf32>
    %5 = tpu.matmul %3, %4, %cst {dimension_numbers = #tpu.dot_dimension_numbers<[1], [0], [0], [1], [0, 0, 1, 1], [], []>} : vector<32x8xbf16>, vector<8x16xbf16>, vector<32x16xf32> -> vector<32x16xf32>
    %c0_5 = arith.constant 0 : index
    %c0_6 = arith.constant 0 : index
    %6 = vector.load %arg4[%c0_5, %c0_6] : memref<1x16xf32, #tpu.memory_space<vmem>>, vector<1x16xf32>
    %7 = vector.broadcast %6 : vector<1x16xf32> to vector<32x16xf32>
    %8 = arith.addf %5, %7 : vector<32x16xf32>
    %9 = vector.shape_cast %8 : vector<32x16xf32> to vector<4x8x16xf32>
    %c0_7 = arith.constant 0 : index
    %c0_8 = arith.constant 0 : index
    %c0_9 = arith.constant 0 : index
    %c0_10 = arith.constant 0 : index
    %10 = vector.load %arg5[%c0_7, %c0_8, %c0_9, %c0_10] : memref<1x4x8x16xf32, #tpu.memory_space<vmem>>, vector<1x4x8x16xf32>
    %11 = vector.shape_cast %10 : vector<1x4x8x16xf32> to vector<4x8x16xf32>
    %12 = vector.shape_cast %9 : vector<4x8x16xf32> to vector<1x4x8x16xf32>
    tpu.vector_store %arg5[%c0_7, %c0_8, %c0_9, %c0_10], %12 {strides = array<i32>} : memref<1x4x8x16xf32, #tpu.memory_space<vmem>>, vector<1x4x8x16xf32>,
    return
  }
  func.func @transform_0(%arg0: i32, %arg1: i32) -> (i32, i32, i32, i32) {
    %c0_i32 = arith.constant 0 : i32
    %c0_i32_0 = arith.constant 0 : i32
    %c0_i32_1 = arith.constant 0 : i32
    return %arg0, %arg1, %c0_i32, %c0_i32_0 : i32, i32, i32, i32
  }
  func.func @transform_1(%arg0: i32, %arg1: i32) -> (i32, i32) {
    %c0_i32 = arith.constant 0 : i32
    %c0_i32_0 = arith.constant 0 : i32
    %c0_i32_1 = arith.constant 0 : i32
    return %c0_i32, %c0_i32_0 : i32, i32
  }
  func.func @transform_2(%arg0: i32, %arg1: i32) -> (i32, i32) {
    %c0_i32 = arith.constant 0 : i32
    %c0_i32_0 = arith.constant 0 : i32
    %c0_i32_1 = arith.constant 0 : i32
    return %c0_i32, %c0_i32_0 : i32, i32
  }
  func.func @transform_3(%arg0: i32, %arg1: i32) -> (i32, i32, i32, i32) {
    %c0_i32 = arith.constant 0 : i32
    %c0_i32_0 = arith.constant 0 : i32
    %c0_i32_1 = arith.constant 0 : i32
    return %arg0, %arg1, %c0_i32, %c0_i32_0 : i32, i32, i32, i32
  }
}

</mosaic_0001>

<llo_original>
// kernel: tpu_custom_call.1
$region0: #{tpu_custom_call.1}
  #allocation0 [shape = 'u32[]', space=smem, size = 0x4, offset = 0x4, fixed_abs, tag = 'smem constant byte address 0x4 - core index']
  #allocation1 [shape = 'u32[144,128]{1,0:T(1,128)}', space=vmem, size = 0x12000, scoped, tag = 'internal scratch']
  %s0 = inlined_call_operand.vmem [shape: f32[2,16,16,8], index: 0, kind: input, shape index: {}]
  %s1 = inlined_call_operand.vmem [shape: bf16[8,16], index: 1, kind: input, shape index: {}]
  %s2 = inlined_call_operand.vmem [shape: f32[1,16], index: 2, kind: input, shape index: {}]
  %s3 = inlined_call_operand.hbm [shape: f32[2,8,8,16], index: 3, kind: output, shape index: {}]
  %s4 = sld [smem:[#allocation0]]
  $region45: #{tpu_custom_call.1} parent=0
    _
  %s6 = ssub.s32 1, %s4
  %s7 = scalar_select 0, %s6, %s4
  $region1: #{tpu_custom_call.1} parent=0
    #allocation2 [shape = 'u8[32768]{0}', space=vmem, size = 0x8000, scoped, tag = 'output window, operand 0']
    #allocation3 [shape = 's32[2]{0}', space=sflag, size = 0x8, scoped, tag = 'scoped memory for tpu_custom_call.1']
    %8 = vsyncpa [#allocation3], 0
    %s9 = scalar_lea.sflag [#allocation3], 1
    %10 = vsyncpa %s9, 0
    loop: start=0, step=1, limit=6
    $region2: #{tpu_custom_call.1} parent=1 // loop_pre_header
      _
    $region3: #{tpu_custom_call.1} parent=1 // loop_header
      %s12 = sphi 0, %s16
      %p13 = scmp.ge.s32.totalorder %s12, 6
      %s19 = sphi 0, %s31
      %s20 = sphi 0, %s27
      %s21 = sphi 0, %s19
      %s22 = sphi 0, %s20
      %s23 = sphi 0, %s21
      %s24 = sphi 0, %s22
      %s36 = sphi 0, %s38
      %s39 = sphi 0, %s36
      %s40 = sphi 0, %s39
      %s56 = sphi 0, %s40
      %s60 = sphi 0, %s60
      %s62 = sphi 0, %s60
      %s63 = sphi 0, %s62
      %s77 = sphi 0, %s63
      %s81 = sphi 0, %s81
      %s83 = sphi 0, %s81
      %s84 = sphi 0, %s83
      %s98 = sphi 0, %s84
      %s106 = sphi 0, %s108
      %s109 = sphi 0, %s106
      %s110 = sphi 0, %s109
      %s126 = sphi 0, %s110
    $region4: #{tpu_custom_call.1} parent=1 // loop_header_branch
      %15 = sbr.rel (%p13) target = $region8
    $region5: #{tpu_custom_call.1} parent=1 // loop_body
      %s17 = ssub.s32 %s12, 1
      %s18 = ssub.s32 %s12, 2
      %s25 = sadd.s32 1, %s20
      %p26 = scmp.ge.s32.totalorder %s25, 2
      %s27 = scalar_select %p26, 0, %s25
      %s28 = sadd.s32 1, %s19
      %s29 = scalar_select %p26, %s28, %s19
      %p30 = scmp.ge.s32.totalorder %s29, 2
      %s31 = scalar_select %p30, 0, %s29
      %s32 = ssub.s32 %s19, %s31
      %s33 = ssub.s32 %s20, %s27
      %s34 = sor.u32 %s32, %s33
      %p35 = scmp.eq.s32.totalorder %s34, 0
      %s37 = sadd.s32 %s36, 1
      %s38 = scalar_select %p35, %s36, %s37
      %p41 = pneg %p35
      %p42 = scmp.eq.s32.totalorder %s12, 3
      %p43 = por %p41, %p42
      %p44 = scmp.ne.s32.totalorder %s36, %s39
      %p45 = scmp.eq.s32.totalorder %s12, 0
      %p46 = por %p44, %p45
      %p47 = scmp.ne.s32.totalorder %s36, %s39
      %p48 = scmp.eq.s32.totalorder %s17, 3
      %p49 = por %p47, %p48
      %p50 = scmp.ne.s32.totalorder %s39, %s40
      %p51 = scmp.eq.s32.totalorder %s17, 0
      %p52 = por %p50, %p51
      %p53 = scmp.ne.s32.totalorder %s39, %s40
      %p54 = scmp.eq.s32.totalorder %s18, 3
      %p55 = por %p53, %p54
      %p57 = scmp.ne.s32.totalorder %s40, %s56
      %p58 = scmp.eq.s32.totalorder %s18, 0
      %p59 = por %p57, %p58
      %s61 = sadd.s32 %s60, 1
      %p64 = scmp.eq.s32.totalorder %s12, 3
      %p65 = scmp.ne.s32.totalorder %s60, %s62
      %p66 = scmp.eq.s32.totalorder %s12, 0
      %p67 = por %p65, %p66
      %p68 = scmp.ne.s32.totalorder %s60, %s62
      %p69 = scmp.eq.s32.totalorder %s17, 3
      %p70 = por %p68, %p69
      %p71 = scmp.ne.s32.totalorder %s62, %s63
      %p72 = scmp.eq.s32.totalorder %s17, 0
      %p73 = por %p71, %p72
      %p74 = scmp.ne.s32.totalorder %s62, %s63
      %p75 = scmp.eq.s32.totalorder %s18, 3
      %p76 = por %p74, %p75
      %p78 = scmp.ne.s32.totalorder %s63, %s77
      %p79 = scmp.eq.s32.totalorder %s18, 0
      %p80 = por %p78, %p79
      %s82 = sadd.s32 %s81, 1
      %p85 = scmp.eq.s32.totalorder %s12, 3
      %p86 = scmp.ne.s32.totalorder %s81, %s83
      %p87 = scmp.eq.s32.totalorder %s12, 0
      %p88 = por %p86, %p87
      %p89 = scmp.ne.s32.totalorder %s81, %s83
      %p90 = scmp.eq.s32.totalorder %s17, 3
      %p91 = por %p89, %p90
      %p92 = scmp.ne.s32.totalorder %s83, %s84
      %p93 = scmp.eq.s32.totalorder %s17, 0
      %p94 = por %p92, %p93
      %p95 = scmp.ne.s32.totalorder %s83, %s84
      %p96 = scmp.eq.s32.totalorder %s18, 3
      %p97 = por %p95, %p96
      %p99 = scmp.ne.s32.totalorder %s84, %s98
      %p100 = scmp.eq.s32.totalorder %s18, 0
      %p101 = por %p99, %p100
      %s102 = ssub.s32 %s19, %s31
      %s103 = ssub.s32 %s20, %s27
      %s104 = sor.u32 %s102, %s103
      %p105 = scmp.eq.s32.totalorder %s104, 0
      %s107 = sadd.s32 %s106, 1
      %s108 = scalar_select %p105, %s106, %s107
      %p111 = pneg %p105
      %p112 = scmp.eq.s32.totalorder %s12, 3
      %p113 = por %p111, %p112
      %p114 = scmp.ne.s32.totalorder %s106, %s109
      %p115 = scmp.eq.s32.totalorder %s12, 0
      %p116 = por %p114, %p115
      %p117 = scmp.ne.s32.totalorder %s106, %s109
      %p118 = scmp.eq.s32.totalorder %s17, 3
      %p119 = por %p117, %p118
      %p120 = scmp.ne.s32.totalorder %s109, %s110
      %p121 = scmp.eq.s32.totalorder %s17, 0
      %p122 = por %p120, %p121
      %p123 = scmp.ne.s32.totalorder %s109, %s110
      %p124 = scmp.eq.s32.totalorder %s18, 3
      %p125 = por %p123, %p124
      %p127 = scmp.ne.s32.totalorder %s110, %s126
      %p128 = scmp.eq.s32.totalorder %s18, 0
      %p129 = por %p127, %p128
      %p130 = scmp.le.s32.totalorder 1, %s12
      %p131 = scmp.lt.s32.totalorder %s12, 5
      %p132 = pnand %p130, %p131
      %p133 = pneg %p132
      // Predicated region
      $region9: #{tpu_custom_call.1} parent=5 // pred_check
        _
      $region10: #{tpu_custom_call.1} parent=5 // pred_check_branch
        %135 = sbr.rel (%p132) target = $region12
      $region11: #{tpu_custom_call.1} parent=5 // pred_region
        %s136 = ssub.s32 %s12, 1
        // Predicated region
        $region13: #{tpu_custom_call.1} parent=11 // pred_check
          %p137 = pneg %p73
        $region14: #{tpu_custom_call.1} parent=11 // pred_check_branch
          %139 = sbr.rel (%p137) target = $region16
        $region15: #{tpu_custom_call.1} parent=11 // pred_region
          _
        $region16: #{tpu_custom_call.1} parent=11 // pred_fallthru
          _
        // Predicated region
        $region17: #{tpu_custom_call.1} parent=11 // pred_check
          %p140 = pneg %p94
        $region18: #{tpu_custom_call.1} parent=11 // pred_check_branch
          %142 = sbr.rel (%p140) target = $region20
        $region19: #{tpu_custom_call.1} parent=11 // pred_region
          _
        $region20: #{tpu_custom_call.1} parent=11 // pred_fallthru
          _
      $region12: #{tpu_custom_call.1} parent=5 // pred_fallthru
        _
      %p143 = scmp.lt.s32.totalorder %s12, 4
      // Predicated region
      $region21: #{tpu_custom_call.1} parent=5 // pred_check
        %p144 = pneg %p143
      $region22: #{tpu_custom_call.1} parent=5 // pred_check_branch
        %146 = sbr.rel (%p144) target = $region24
      $region23: #{tpu_custom_call.1} parent=5 // pred_region
        // Predicated region
        $region25: #{tpu_custom_call.1} parent=23 // pred_check
          %p147 = pneg %p46
        $region26: #{tpu_custom_call.1} parent=23 // pred_check_branch
          %149 = sbr.rel (%p147) target = $region28
        $region27: #{tpu_custom_call.1} parent=23 // pred_region
          %s150 = smul.u32 8, %s20
          %p151 = scmp.lt.s32.totalorder %s19, 1
          %s152 = scalar_select %p151, %s19, 1
          %p153 = scmp.lt.s32.totalorder %s150, 15
          %s154 = scalar_select %p153, %s150, 15
          %s155 = smul.addr %s154, 2
          %s156 = smul.addr %s152, 32
          %s157 = sadd.s32 %s155, %s156
          %s158 = smul.addr %s157, 8
          %s159 = scalar_lea.vmem %s0, %s158
          %s160 = smul.u32 8, %s20
        $region28: #{tpu_custom_call.1} parent=23 // pred_fallthru
          _
      $region24: #{tpu_custom_call.1} parent=5 // pred_fallthru
        _
      %p161 = scmp.le.s32.totalorder 1, %s12
      %p162 = scmp.lt.s32.totalorder %s12, 5
      %p163 = pnand %p161, %p162
      %p164 = pneg %p163
      // Predicated region
      $region29: #{tpu_custom_call.1} parent=5 // pred_check
        _
      $region30: #{tpu_custom_call.1} parent=5 // pred_check_branch
        %166 = sbr.rel (%p163) target = $region32
      $region31: #{tpu_custom_call.1} parent=5 // pred_region
        %s167 = ssub.s32 %s12, 1
        %s168 = smul.u32 8, %s22
        %p169 = scmp.lt.s32.totalorder %s21, 1
        %s170 = scalar_select %p169, %s21, 1
        %p171 = scmp.lt.s32.totalorder %s168, 15
        %s172 = scalar_select %p171, %s168, 15
        %s173 = smul.addr %s172, 2
        %s174 = smul.addr %s170, 32
        %s175 = sadd.s32 %s173, %s174
        %s176 = smul.addr %s175, 8
        %s177 = scalar_lea.vmem %s0, %s176
        %p178 = pneg %p52
        %p179 = pneg %p49
        %p180 = pneg %p73
        %p181 = pneg %p70
        %p182 = pneg %p94
        %p183 = pneg %p91
        %p184 = pneg %p122
        %p185 = pneg %p119
        %s186 = sand.u32 %s109, 1
        %s187 = scalar_lea.sflag [#allocation3], %s186
        %s188 = sand.u32 %s109, 1
        %s189 = smul.addr %s188, 32
        %s190 = scalar_lea.vmem [#allocation2], %s189
        %s191 = smul.u32 8, %s22
        %p192 = scmp.lt.s32.totalorder %s21, 1
        %s193 = scalar_select %p192, %s21, 1
        %p194 = scmp.lt.s32.totalorder %s191, 15
        %s195 = scalar_select %p194, %s191, 15
        %s196 = smul.addr %s195, 2
        %s197 = smul.addr %s193, 32
        %s198 = sadd.s32 %s196, %s197
        %s199 = smul.addr %s198, 8
        %s200 = scalar_lea.vmem %s0, %s199
        %s201 = smul.u32 8, %s22
        %s202 = smul.u32 4, %s22
        %v204 = vld [vmem:[%s200] ss:$2 sm:$0xff]
        %s205 = scalar_lea.vmem %s200, 32
        %v206 = vld [vmem:[%s205] ss:$2 sm:$0xff]
        %s207 = scalar_lea.vmem %s200, 64
        %v208 = vld [vmem:[%s207] ss:$2 sm:$0xff]
        %s209 = scalar_lea.vmem %s200, 96
        %v210 = vld [vmem:[%s209] ss:$2 sm:$0xff]
        %v211 = vpack.c.bf16 %v206, %v204
        %v212 = vpack.c.bf16 %v210, %v208
        %v213 = vld [vmem:[%s1] sm:$0xf]
        %v214 = vld [vmem:[%s2] sm:$0x1]
        %v216 = vlaneseq
        %v217 = vshrl.u32 %v216, 7
        %v218 = vsub.s32 0, %v217
        %v219 = vrot.slane %v214, %v218
        %vm221 = vcmask 64512
        %v223 = vsel %vm221, %v211, 0
        %v226 = vsel %vm221, %v212, 0
        %vm228 = vcmask 1043456
        %v230 = vsel %vm228, %v213, 0
        %232 = vmatprep.subr.bf16.mxu0 0
        %233 = vmatpush1.bf16.msra.mxu0 %v230
        %234 = vmatprep.subr.bf16.mxu0 0
        %235 = vmatpush1.bf16.msra.mxu0 0
        %236 = vmatprep.subr.bf16.mxu0 0
        %237 = vmatpush1.bf16.msra.mxu0 0
        %238 = vmatprep.subr.bf16.mxu0 0
        %239 = vmatpush1.bf16.msra.mxu0 0
        %240 = vmatprep.subr.bf16.mxu0 0
        %241 = vmatpush1.bf16.msra.mxu0 0
        %242 = vmatprep.subr.bf16.mxu0 0
        %243 = vmatpush1.bf16.msra.mxu0 0
        %244 = vmatprep.subr.bf16.mxu0 0
        %245 = vmatpush1.bf16.msra.mxu0 0
        %246 = vmatprep.subr.bf16.mxu0 0
        %247 = vmatpush1.bf16.msra.mxu0 0
        %248 = vmatprep.subr.bf16.mxu0 0
        %249 = vmatpush1.bf16.msra.mxu0 0
        %250 = vmatprep.subr.bf16.mxu0 0
        %251 = vmatpush1.bf16.msra.mxu0 0
        %252 = vmatprep.subr.bf16.mxu0 0
        %253 = vmatpush1.bf16.msra.mxu0 0
        %254 = vmatprep.subr.bf16.mxu0 0
        %255 = vmatpush1.bf16.msra.mxu0 0
        %256 = vmatprep.subr.bf16.mxu0 0
        %257 = vmatpush1.bf16.msra.mxu0 0
        %258 = vmatprep.subr.bf16.mxu0 0
        %259 = vmatpush1.bf16.msra.mxu0 0
        %260 = vmatprep.subr.bf16.mxu0 0
        %261 = vmatpush1.bf16.msra.mxu0 0
        %262 = vmatprep.subr.bf16.mxu0 0
        %263 = vmatpush1.bf16.msra.mxu0 0
        %264 = vmatprep.mubr.bf16.mxu0 0
        %265 = vmatmul.mubr.bf16.gmra.mrb[0].mxu0 %v223
        %v266 = vpop.f32.mrb[0].mxu0
        %v267 = vadd.f32 %v219, %v266
        %v268 = vpop.f32.mrb[0].mxu0
        %v269 = vpop.f32.mrb[0].mxu0
        %v270 = vadd.f32 %v219, %v269
        %v271 = vpop.f32.mrb[0].mxu0
        %272 = vmatprep.mubr.bf16.mxu0 0
        %273 = vmatmul.mubr.bf16.gmra.mrb[0].mxu0 %v226
        %v274 = vpop.f32.mrb[0].mxu0
        %v275 = vadd.f32 %v219, %v274
        %v276 = vpop.f32.mrb[0].mxu0
        %v277 = vpop.f32.mrb[0].mxu0
        %v278 = vadd.f32 %v219, %v277
        %v279 = vpop.f32.mrb[0].mxu0
        %280 = vdwg.mxu0
        %vm281 = vcmask 130048
        %282 = vst.msk [vmem:[%s190] sm:$0xff] %vm281, %v267
        %283 = vst.msk [vmem:[%s190 + $0x8] sm:$0xff] %vm281, %v270
        %284 = vst.msk [vmem:[%s190 + $0x10] sm:$0xff] %vm281, %v275
        %285 = vst.msk [vmem:[%s190 + $0x18] sm:$0xff] %vm281, %v278
        %s286 = sand.u32 %s109, 1
        %s287 = scalar_lea.sflag [#allocation3], %s286
        %s288 = sand.u32 %s109, 1
        %s289 = smul.addr %s288, 32
        %s290 = scalar_lea.vmem [#allocation2], %s289
        // Predicated region
        $region33: #{tpu_custom_call.1} parent=31 // pred_check
          %p291 = pneg %p119
        $region34: #{tpu_custom_call.1} parent=31 // pred_check_branch
          %293 = sbr.rel (%p291) target = $region36
        $region35: #{tpu_custom_call.1} parent=31 // pred_region
          %s294 = smul.u32 4, %s22
          %s296 = ssub.s32 512, 512
          %297 = vsyncadd %s287, %s296
          %s298 = smul.addr %s21, 8
          %s299 = sadd.s32 %s294, %s298
          %s300 = smul.addr %s299, 128
          %s301 = scalar_lea.hbm %s3, %s300
          %s302 = sshll.u32 %s290, 4
          %s303 = int_to_ptr.vmem [resolvable:$true] %s302
          %308 = dma.vmem_to_hbm [thread:$0]  %s303, 512, %s301, %s287, 128, 128, 8
        $region36: #{tpu_custom_call.1} parent=31 // pred_fallthru
          _
      $region32: #{tpu_custom_call.1} parent=5 // pred_fallthru
        _
      %p309 = scmp.le.s32.totalorder 2, %s12
      // Predicated region
      $region37: #{tpu_custom_call.1} parent=5 // pred_check
        %p310 = pneg %p309
      $region38: #{tpu_custom_call.1} parent=5 // pred_check_branch
        %312 = sbr.rel (%p310) target = $region40
      $region39: #{tpu_custom_call.1} parent=5 // pred_region
        %s313 = ssub.s32 %s12, 2
        // Predicated region
        $region41: #{tpu_custom_call.1} parent=39 // pred_check
          %p314 = pneg %p125
        $region42: #{tpu_custom_call.1} parent=39 // pred_check_branch
          %316 = sbr.rel (%p314) target = $region44
        $region43: #{tpu_custom_call.1} parent=39 // pred_region
          %s317 = sand.u32 %s110, 1
          %s318 = scalar_lea.sflag [#allocation3], %s317
          %s319 = sand.u32 %s110, 1
          %s320 = smul.addr %s319, 32
          %s321 = scalar_lea.vmem [#allocation2], %s320
          %322 = dma.done %s318, 512
        $region44: #{tpu_custom_call.1} parent=39 // pred_fallthru
          _
      $region40: #{tpu_custom_call.1} parent=5 // pred_fallthru
        _
    $region6: #{tpu_custom_call.1} parent=1 // loop_footer
      %s16 = sadd.s32 1, %s12
    $region7: #{tpu_custom_call.1} parent=1 // loop_footer_branch
      %11 = sbr.rel target = $region3
    $region8: #{tpu_custom_call.1} parent=1 // loop_exit
      _
    %323 = vsyncpa [#allocation3], 1
    %s324 = scalar_lea.sflag [#allocation3], 1
    %325 = vsyncpa %s324, 1

</llo_original>
